<compile_context>
chip_gen: v5e
topology: v5e:2x2
jax: 0.10.0
libtpu: 0.0.40
codegen_flags: <defaults>
</compile_context>

<pallas_src>
import functools
import math

import jax
import jax.numpy as jnp
from jax.experimental import pallas as pl
from jax.experimental.pallas import tpu as pltpu


# ---------------------------------------------------------------------------
# Kernel: three MXU matmuls, all operands already in native [M,K] x [K,N] form.
# ---------------------------------------------------------------------------
def _sample_generator_kernel(dp_ref, zp_ref, w1d_ref, w1z_ref, b1_ref, w2_ref, b2_ref, o_ref):
    # dp_ref: [tr, pack*label_dim]      zp_ref: [tr, pack*latent_dim]
    # w1d_ref: [pack*label_dim, pack*hidden]   w1z_ref: [pack*latent_dim, pack*hidden]
    # b1_ref: [1, pack*hidden]
    # w2_ref: [pack*hidden, pack*out]   b2_ref: [1, pack*out]
    # o_ref : [tr, pack*out]  (lane-dense, pack*out is a multiple of 128)
    h = jnp.dot(dp_ref[...], w1d_ref[...], preferred_element_type=jnp.float32)
    h = h + jnp.dot(zp_ref[...], w1z_ref[...], preferred_element_type=jnp.float32)
    h = jnp.maximum(h + b1_ref[...], 0.0)                       # fc1 bias + ReLU (f32)
    y = jnp.dot(h, w2_ref[...], preferred_element_type=jnp.float32) + b2_ref[...]
    o_ref[...] = y.astype(o_ref.dtype)


# ---------------------------------------------------------------------------
# One-time parameter preparation (call once at init, NOT per forward).
# ---------------------------------------------------------------------------
def _block_diag(w_t, pack):
    """[K, N] -> block-diagonal [pack*K, pack*N] with `pack` copies of w_t on the diagonal."""
    k, n = w_t.shape
    eye = jnp.eye(pack, dtype=w_t.dtype)
    return jnp.einsum("pq,kn->pkqn", eye, w_t).reshape(pack * k, pack * n)


def prepare_sample_generator_params(w1, b1, w2, b2, label_dim, dtype=jnp.float32):
    """Split fc1's weight into d/z halves, transpose to [in, out], block-diagonalise for
    lane-dense packing, and tile the biases.  Weights stay resident in VMEM at runtime."""
    w1 = jnp.asarray(w1, dtype)
    b1 = jnp.asarray(b1, dtype)
    w2 = jnp.asarray(w2, dtype)
    b2 = jnp.asarray(b2, dtype)
    hidden_dim, in_features = w1.shape
    out_features = w2.shape[0]
    latent_dim = in_features - label_dim

    # pack batch-rows per lane-row so the output width (pack*out_features) is a multiple of 128.
    pack = 128 // math.gcd(out_features, 128)

    w1d_bd = _block_diag(w1[:, :label_dim].T, pack)       # [pack*label,  pack*hidden]
    w1z_bd = _block_diag(w1[:, label_dim:].T, pack)       # [pack*latent, pack*hidden]
    w2_bd = _block_diag(w2.T, pack)                        # [pack*hidden, pack*out]
    b1_t = jnp.tile(b1, pack).reshape(1, pack * hidden_dim)
    b2_t = jnp.tile(b2, pack).reshape(1, pack * out_features)

    dims = dict(label_dim=int(label_dim), latent_dim=int(latent_dim),
                hidden_dim=int(hidden_dim), out_features=int(out_features), pack=int(pack))
    return (w1d_bd, w1z_bd, b1_t, w2_bd, b2_t, dims)


# ---------------------------------------------------------------------------
# Batch tiling plan.
# ---------------------------------------------------------------------------
def _round_up(x, m):
    return ((x + m - 1) // m) * m


def _plan_batch(B, pack):
    # Packed per-step footprint is ~112 B per batch row (d+z+out, lane-dense), so very
    # large tiles fit every generation's scoped VMEM (v5e 16 MiB ... v7x 32 MiB default).
    MAX_TILE_ROWS = 16384
    SINGLE_BLOCK_MAX = 256   # below this the call is launch/DMA overhead anyway
    if B <= SINGLE_BLOCK_MAX:
        tile_rows = _round_up(B, pack)           # one block == full (padded) array
        return tile_rows, tile_rows, 1
    # >= 2 grid steps so dimension_semantics=("parallel",) shards across v7x's 2 TCs.
    steps = max(2, pl.cdiv(B, MAX_TILE_ROWS))
    # 8*pack row alignment => packed-row block height is a multiple of 8 (sublane rule).
    tile_rows = _round_up(pl.cdiv(B, steps), 8 * pack)
    return tile_rows * steps, tile_rows, steps


# ---------------------------------------------------------------------------
# Forward.
# ---------------------------------------------------------------------------
@functools.partial(jax.jit, static_argnames=("label_dim", "latent_dim", "hidden_dim",
                                             "out_features", "pack"))
def _forward_impl(d, z, w1d_bd, w1z_bd, b1_t, w2_bd, b2_t, *,
                  label_dim, latent_dim, hidden_dim, out_features, pack):
    B = d.shape[0]
    Bp, tile_rows, steps = _plan_batch(B, pack)
    if Bp != B:
        d = jnp.pad(d, ((0, Bp - B), (0, 0)))
        z = jnp.pad(z, ((0, Bp - B), (0, 0)))

    r = Bp // pack                 # packed rows total
    tr = tile_rows // pack         # packed rows per grid step

    # Zero-copy (row-major) lane-dense packing of the activations.
    dp = d.reshape(r, pack * label_dim)
    zp = z.reshape(r, pack * latent_dim)

    itemsize = jnp.dtype(d.dtype).itemsize
    flops = 2 * r * pack * pack * hidden_dim * (label_dim + latent_dim + out_features)
    bytes_accessed = (itemsize * (dp.size + zp.size + r * pack * out_features)
                      + 4 * (w1d_bd.size + w1z_bd.size + b1_t.size + w2_bd.size + b2_t.size))

    def resident(a):
        return pl.BlockSpec(a.shape, lambda i: (0, 0))

    out_packed = pl.pallas_call(
        _sample_generator_kernel,
        out_shape=jax.ShapeDtypeStruct((r, pack * out_features), d.dtype),
        grid=(steps,),
        in_specs=[
            pl.BlockSpec((tr, pack * label_dim), lambda i: (i, 0)),
            pl.BlockSpec((tr, pack * latent_dim), lambda i: (i, 0)),
            resident(w1d_bd),
            resident(w1z_bd),
            resident(b1_t),
            resident(w2_bd),
            resident(b2_t),
        ],
        out_specs=pl.BlockSpec((tr, pack * out_features), lambda i: (i, 0)),
        compiler_params=pltpu.CompilerParams(
            dimension_semantics=("parallel",),
            vmem_limit_bytes=32 * 1024 * 1024,
        ),
        cost_estimate=pl.CostEstimate(flops=flops, transcendentals=0,
                                      bytes_accessed=bytes_accessed),
    )(dp, zp, w1d_bd, w1z_bd, b1_t, w2_bd, b2_t)

    out = out_packed.reshape(Bp, out_features)
    return out[:B] if Bp != B else out


def sample_generator_forward(d, z, params):
    """d: [B, label_dim], z: [B, latent_dim] -> [B, out_features] (dtype of d/z)."""
    w1d_bd, w1z_bd, b1_t, w2_bd, b2_t, dims = params
    # TODO(synk): for B <= ~32 the whole call is launch overhead; a plain XLA fallback
    # could be used there if this ever sits on a latency-critical path.
    return _forward_impl(d, z, w1d_bd, w1z_bd, b1_t, w2_bd, b2_t, **dims)


def reference_forward(d, z, w1, b1, w2, b2):
    x = jnp.concatenate([d, z], axis=1)
    h = jnp.maximum(x @ w1.T + b1, 0.0)
    return h @ w2.T + b2


if __name__ == "__main__":
    # Module hyperparameters (consistent with the PyTorch module).
    label_dim = 4
    latent_dim = 16
    hidden_dim = 32
    out_features = 8

    key = jax.random.PRNGKey(0)
    kw1, kb1, kw2, kb2, kd, kz, kd2, kz2 = jax.random.split(key, 8)

    # Deterministic synthetic parameters (PyTorch [out, in] layout).
    w1 = jax.random.normal(kw1, (hidden_dim, label_dim + latent_dim), jnp.float32) * 0.1
    b1 = jax.random.normal(kb1, (hidden_dim,), jnp.float32) * 0.1
    w2 = jax.random.normal(kw2, (out_features, hidden_dim), jnp.float32) * 0.1
    b2 = jax.random.normal(kb2, (out_features,), jnp.float32) * 0.1

    # One-time prep (transpose + block-diagonalise weights, tile biases).
    params = prepare_sample_generator_params(w1, b1, w2, b2, label_dim)

    # Small batch (single lane-dense block, padded from 2 to 16 rows internally).
    batch = 2
    d = jax.random.normal(kd, (batch, label_dim), jnp.float32)
    z = jax.random.normal(kz, (batch, latent_dim), jnp.float32)
    out = jax.block_until_ready(sample_generator_forward(d, z, params))
    ref = reference_forward(d, z, w1, b1, w2, b2)
    assert out.shape == (batch, out_features)
    assert jnp.allclose(out, ref, atol=1e-5, rtol=1e-5), "small-batch mismatch vs reference"

    # Larger batch exercising the multi-step grid (2 tiles) and tail padding.
    batch2 = 1000
    d2 = jax.random.normal(kd2, (batch2, label_dim), jnp.float32)
    z2 = jax.random.normal(kz2, (batch2, latent_dim), jnp.float32)
    out2 = jax.block_until_ready(sample_generator_forward(d2, z2, params))
    ref2 = reference_forward(d2, z2, w1, b1, w2, b2)
    assert out2.shape == (batch2, out_features)
    assert jnp.allclose(out2, ref2, atol=1e-4, rtol=1e-4), "tiled-batch mismatch vs reference"

    print("KERNEL_OK")
</pallas_src>

<mosaic_0001>
module attributes {stable_mosaic.version = 11 : i64} {
  func.func @_sample_generator_kernel(%arg0: i32, %arg1: memref<1x64xf32, #tpu.memory_space<vmem>>, %arg2: memref<1x256xf32, #tpu.memory_space<vmem>>, %arg3: memref<64x512xf32, #tpu.memory_space<vmem>>, %arg4: memref<256x512xf32, #tpu.memory_space<vmem>>, %arg5: memref<1x512xf32, #tpu.memory_space<vmem>>, %arg6: memref<512x128xf32, #tpu.memory_space<vmem>>, %arg7: memref<1x128xf32, #tpu.memory_space<vmem>>, %arg8: memref<1x128xf32, #tpu.memory_space<vmem>>) attributes {dimension_semantics = [#tpu.dimension_semantics<parallel>], iteration_bounds = array<i64: 1>, scalar_prefetch = 0 : i64, scratch_operands = 0 : i64, tpu.core_type = #tpu.core_type<tc>, window_params = [{transform_indices = @transform_0, window_bounds = array<i64: 1, 64>}, {transform_indices = @transform_1, window_bounds = array<i64: 1, 256>}, {pipeline_mode = #tpu.pipeline_mode<synchronous>, transform_indices = @transform_2, window_bounds = array<i64: 64, 512>}, {pipeline_mode = #tpu.pipeline_mode<synchronous>, transform_indices = @transform_3, window_bounds = array<i64: 256, 512>}, {pipeline_mode = #tpu.pipeline_mode<synchronous>, transform_indices = @transform_4, window_bounds = array<i64: 1, 512>}, {pipeline_mode = #tpu.pipeline_mode<synchronous>, transform_indices = @transform_5, window_bounds = array<i64: 512, 128>}, {pipeline_mode = #tpu.pipeline_mode<synchronous>, transform_indices = @transform_6, window_bounds = array<i64: 1, 128>}, {transform_indices = @transform_7, window_bounds = array<i64: 1, 128>}]} {
    %c0 = arith.constant 0 : index
    %c0_0 = arith.constant 0 : index
    %0 = vector.load %arg1[%c0, %c0_0] : memref<1x64xf32, #tpu.memory_space<vmem>>, vector<1x64xf32>
    %c0_1 = arith.constant 0 : index
    %c0_2 = arith.constant 0 : index
    %1 = vector.load %arg3[%c0_1, %c0_2] : memref<64x512xf32, #tpu.memory_space<vmem>>, vector<64x512xf32>
    %cst = arith.constant dense<0.000000e+00> : vector<1x512xf32>
    %2 = tpu.matmul %0, %1, %cst {dimension_numbers = #tpu.dot_dimension_numbers<[1], [0], [0], [1], [0, 0, 1, 1], [], []>} : vector<1x64xf32>, vector<64x512xf32>, vector<1x512xf32> -> vector<1x512xf32>
    %c0_3 = arith.constant 0 : index
    %c0_4 = arith.constant 0 : index
    %3 = vector.load %arg2[%c0_3, %c0_4] : memref<1x256xf32, #tpu.memory_space<vmem>>, vector<1x256xf32>
    %c0_5 = arith.constant 0 : index
    %c0_6 = arith.constant 0 : index
    %4 = vector.load %arg4[%c0_5, %c0_6] : memref<256x512xf32, #tpu.memory_space<vmem>>, vector<256x512xf32>
    %cst_7 = arith.constant dense<0.000000e+00> : vector<1x512xf32>
    %5 = tpu.matmul %3, %4, %cst_7 {dimension_numbers = #tpu.dot_dimension_numbers<[1], [0], [0], [1], [0, 0, 1, 1], [], []>} : vector<1x256xf32>, vector<256x512xf32>, vector<1x512xf32> -> vector<1x512xf32>
    %6 = arith.addf %2, %5 : vector<1x512xf32>
    %c0_8 = arith.constant 0 : index
    %c0_9 = arith.constant 0 : index
    %7 = vector.load %arg5[%c0_8, %c0_9] : memref<1x512xf32, #tpu.memory_space<vmem>>, vector<1x512xf32>
    %8 = arith.addf %6, %7 : vector<1x512xf32>
    %cst_10 = arith.constant 0.000000e+00 : f32
    %9 = vector.broadcast %cst_10 : f32 to vector<1x512xf32>
    %10 = arith.maximumf %8, %9 : vector<1x512xf32>
    %c0_11 = arith.constant 0 : index
    %c0_12 = arith.constant 0 : index
    %11 = vector.load %arg6[%c0_11, %c0_12] : memref<512x128xf32, #tpu.memory_space<vmem>>, vector<512x128xf32>
    %cst_13 = arith.constant dense<0.000000e+00> : vector<1x128xf32>
    %12 = tpu.matmul %10, %11, %cst_13 {dimension_numbers = #tpu.dot_dimension_numbers<[1], [0], [0], [1], [0, 0, 1, 1], [], []>} : vector<1x512xf32>, vector<512x128xf32>, vector<1x128xf32> -> vector<1x128xf32>
    %c0_14 = arith.constant 0 : index
    %c0_15 = arith.constant 0 : index
    %13 = vector.load %arg7[%c0_14, %c0_15] : memref<1x128xf32, #tpu.memory_space<vmem>>, vector<1x128xf32>
    %14 = arith.addf %12, %13 : vector<1x128xf32>
    %c0_16 = arith.constant 0 : index
    %c0_17 = arith.constant 0 : index
    %15 = vector.load %arg8[%c0_16, %c0_17] : memref<1x128xf32, #tpu.memory_space<vmem>>, vector<1x128xf32>
    tpu.vector_store %arg8[%c0_16, %c0_17], %14 {strides = array<i32>} : memref<1x128xf32, #tpu.memory_space<vmem>>, vector<1x128xf32>,
    return
  }
  func.func @transform_0(%arg0: i32) -> (i32, i32) {
    %c0_i32 = arith.constant 0 : i32
    %c0_i32_0 = arith.constant 0 : i32
    return %arg0, %c0_i32 : i32, i32
  }
  func.func @transform_1(%arg0: i32) -> (i32, i32) {
    %c0_i32 = arith.constant 0 : i32
    %c0_i32_0 = arith.constant 0 : i32
    return %arg0, %c0_i32 : i32, i32
  }
  func.func @transform_2(%arg0: i32) -> (i32, i32) {
    %c0_i32 = arith.constant 0 : i32
    %c0_i32_0 = arith.constant 0 : i32
    %c0_i32_1 = arith.constant 0 : i32
    return %c0_i32, %c0_i32_0 : i32, i32
  }
  func.func @transform_3(%arg0: i32) -> (i32, i32) {
    %c0_i32 = arith.constant 0 : i32
    %c0_i32_0 = arith.constant 0 : i32
    %c0_i32_1 = arith.constant 0 : i32
    return %c0_i32, %c0_i32_0 : i32, i32
  }
  func.func @transform_4(%arg0: i32) -> (i32, i32) {
    %c0_i32 = arith.constant 0 : i32
    %c0_i32_0 = arith.constant 0 : i32
    %c0_i32_1 = arith.constant 0 : i32
    return %c0_i32, %c0_i32_0 : i32, i32
  }
  func.func @transform_5(%arg0: i32) -> (i32, i32) {
    %c0_i32 = arith.constant 0 : i32
    %c0_i32_0 = arith.constant 0 : i32
    %c0_i32_1 = arith.constant 0 : i32
    return %c0_i32, %c0_i32_0 : i32, i32
  }
  func.func @transform_6(%arg0: i32) -> (i32, i32) {
    %c0_i32 = arith.constant 0 : i32
    %c0_i32_0 = arith.constant 0 : i32
    %c0_i32_1 = arith.constant 0 : i32
    return %c0_i32, %c0_i32_0 : i32, i32
  }
  func.func @transform_7(%arg0: i32) -> (i32, i32) {
    %c0_i32 = arith.constant 0 : i32
    %c0_i32_0 = arith.constant 0 : i32
    return %arg0, %c0_i32 : i32, i32
  }
}

</mosaic_0001>

<llo_original>
// kernel: _forward_impl.1
$region0: #{_forward_impl.1}
  #allocation0 [shape = 'u32[]', space=smem, size = 0x4, offset = 0x4, fixed_abs, tag = 'smem constant byte address 0x4 - core index']
  #allocation1 [shape = 'u32[72,128]{1,0:T(1,128)}', space=vmem, size = 0x9000, scoped, tag = 'internal scratch']
  %s0 = inlined_call_operand.vmem [shape: f32[1,64], index: 0, kind: input, shape index: {}]
  %s1 = inlined_call_operand.vmem [shape: f32[1,256], index: 1, kind: input, shape index: {}]
  %s2 = inlined_call_operand.hbm [shape: f32[64,512], index: 2, kind: input, shape index: {}]
  %s3 = inlined_call_operand.hbm [shape: f32[256,512], index: 3, kind: input, shape index: {}]
  %s4 = inlined_call_operand.vmem [shape: f32[1,512], index: 4, kind: input, shape index: {}]
  %s5 = inlined_call_operand.hbm [shape: f32[512,128], index: 5, kind: input, shape index: {}]
  %s6 = inlined_call_operand.vmem [shape: f32[1,128], index: 6, kind: input, shape index: {}]
  %s7 = inlined_call_operand.vmem [shape: f32[1,128], index: 7, kind: output, shape index: {}]
  %s8 = sld [smem:[#allocation0]]
  $region50: #{_forward_impl.1} parent=0
    _
  %s10 = ssub.s32 1, %s8
  %s11 = scalar_select 0, %s10, %s8
  $region1: #{_forward_impl.1} parent=0
    #allocation2 [shape = 'u8[131072]{0}', space=vmem, size = 0x20000, scoped, tag = 'input window, operand 2, single buffered']
    #allocation3 [shape = 's32[1]{0}', space=sflag, size = 0x4, scoped, tag = 'scoped memory for _forward_impl.1']
    #allocation4 [shape = 'u8[524288]{0}', space=vmem, size = 0x80000, scoped, tag = 'input window, operand 3, single buffered']
    #allocation5 [shape = 's32[1]{0}', space=sflag, size = 0x4, scoped, tag = 'scoped memory for _forward_impl.1']
    #allocation6 [shape = 'u8[262144]{0}', space=vmem, size = 0x40000, scoped, tag = 'input window, operand 5, single buffered']
    %12 = vsyncpa [#allocation3], 0
    %13 = vsyncpa [#allocation5], 0
    // Predicated region
    $region2: #{_forward_impl.1} parent=1 // pred_check
      _
    $region3: #{_forward_impl.1} parent=1 // pred_check_branch
      %15 = sbr.rel (0) target = $region5
    $region4: #{_forward_impl.1} parent=1 // pred_region
      _
    $region5: #{_forward_impl.1} parent=1 // pred_fallthru
      _
    // Predicated region
    $region6: #{_forward_impl.1} parent=1 // pred_check
      _
    $region7: #{_forward_impl.1} parent=1 // pred_check_branch
      %17 = sbr.rel (0) target = $region9
    $region8: #{_forward_impl.1} parent=1 // pred_region
      _
    $region9: #{_forward_impl.1} parent=1 // pred_fallthru
      _
    // Predicated region
    $region10: #{_forward_impl.1} parent=1 // pred_check
      _
    $region11: #{_forward_impl.1} parent=1 // pred_check_branch
      %19 = sbr.rel (0) target = $region13
    $region12: #{_forward_impl.1} parent=1 // pred_region
      %21 = vsyncadd [#allocation3], 0
      %s22 = sshll.u32 %s2, 4
      %s23 = int_to_ptr.hbm [resolvable:$true] %s22
      %s24 = sshll.u32 [#allocation2], 4
      %s25 = int_to_ptr.vmem [resolvable:$true] %s24
      %30 = dma.hbm_to_vmem [thread:$0]  %s23, 4096, %s25, [#allocation3], 512, 512, 32
    $region13: #{_forward_impl.1} parent=1 // pred_fallthru
      _
    // Predicated region
    $region14: #{_forward_impl.1} parent=1 // pred_check
      _
    $region15: #{_forward_impl.1} parent=1 // pred_check_branch
      %32 = sbr.rel (0) target = $region17
    $region16: #{_forward_impl.1} parent=1 // pred_region
      %34 = vsyncadd [#allocation5], 0
      %s35 = sshll.u32 %s3, 4
      %s36 = int_to_ptr.hbm [resolvable:$true] %s35
      %s37 = sshll.u32 [#allocation4], 4
      %s38 = int_to_ptr.vmem [resolvable:$true] %s37
      %43 = dma.hbm_to_vmem [thread:$0]  %s36, 16384, %s38, [#allocation5], 512, 512, 32
    $region17: #{_forward_impl.1} parent=1 // pred_fallthru
      _
    // Predicated region
    $region18: #{_forward_impl.1} parent=1 // pred_check
      _
    $region19: #{_forward_impl.1} parent=1 // pred_check_branch
      %45 = sbr.rel (0) target = $region21
    $region20: #{_forward_impl.1} parent=1 // pred_region
      _
    $region21: #{_forward_impl.1} parent=1 // pred_fallthru
      _
    // Predicated region
    $region22: #{_forward_impl.1} parent=1 // pred_check
      _
    $region23: #{_forward_impl.1} parent=1 // pred_check_branch
      %47 = sbr.rel (0) target = $region25
    $region24: #{_forward_impl.1} parent=1 // pred_region
      %49 = vsyncadd [#allocation5], 0
      %s50 = sshll.u32 %s5, 4
      %s51 = int_to_ptr.hbm [resolvable:$true] %s50
      %s52 = sshll.u32 [#allocation6], 4
      %s53 = int_to_ptr.vmem [resolvable:$true] %s52
      %58 = dma.hbm_to_vmem [thread:$0]  %s51, 8192, %s53, [#allocation5], 128, 128, 8
    $region25: #{_forward_impl.1} parent=1 // pred_fallthru
      _
    // Predicated region
    $region26: #{_forward_impl.1} parent=1 // pred_check
      _
    $region27: #{_forward_impl.1} parent=1 // pred_check_branch
      %60 = sbr.rel (0) target = $region29
    $region28: #{_forward_impl.1} parent=1 // pred_region
      _
    $region29: #{_forward_impl.1} parent=1 // pred_fallthru
      _
    // Predicated region
    $region30: #{_forward_impl.1} parent=1 // pred_check
      _
    $region31: #{_forward_impl.1} parent=1 // pred_check_branch
      %62 = sbr.rel (0) target = $region33
    $region32: #{_forward_impl.1} parent=1 // pred_region
      %64 = dma.done [#allocation3], 4096
    $region33: #{_forward_impl.1} parent=1 // pred_fallthru
      _
    // Predicated region
    $region34: #{_forward_impl.1} parent=1 // pred_check
      _
    $region35: #{_forward_impl.1} parent=1 // pred_check_branch
      %66 = sbr.rel (0) target = $region37
    $region36: #{_forward_impl.1} parent=1 // pred_region
      %68 = dma.done [#allocation5], 16384
    $region37: #{_forward_impl.1} parent=1 // pred_fallthru
      _
    // Predicated region
    $region38: #{_forward_impl.1} parent=1 // pred_check
      _
    $region39: #{_forward_impl.1} parent=1 // pred_check_branch
      %70 = sbr.rel (0) target = $region41
    $region40: #{_forward_impl.1} parent=1 // pred_region
      %72 = dma.done [#allocation5], 8192
    $region41: #{_forward_impl.1} parent=1 // pred_fallthru
      _
    %v73 = vld [vmem:[%s0] sm:$0x1]
    %v74 = vld [vmem:[#allocation2] sm:$0xff]
    %v75 = vld [vmem:[#allocation2 + $0x8] sm:$0xff]
    %v76 = vld [vmem:[#allocation2 + $0x10] sm:$0xff]
    %v77 = vld [vmem:[#allocation2 + $0x18] sm:$0xff]
    %v78 = vld [vmem:[#allocation2 + $0x20] sm:$0xff]
    %v79 = vld [vmem:[#allocation2 + $0x28] sm:$0xff]
    %v80 = vld [vmem:[#allocation2 + $0x30] sm:$0xff]
    %v81 = vld [vmem:[#allocation2 + $0x38] sm:$0xff]
    %v82 = vld [vmem:[#allocation2 + $0x40] sm:$0xff]
    %v83 = vld [vmem:[#allocation2 + $0x48] sm:$0xff]
    %v84 = vld [vmem:[#allocation2 + $0x50] sm:$0xff]
    %v85 = vld [vmem:[#allocation2 + $0x58] sm:$0xff]
    %v86 = vld [vmem:[#allocation2 + $0x60] sm:$0xff]
    %v87 = vld [vmem:[#allocation2 + $0x68] sm:$0xff]
    %v88 = vld [vmem:[#allocation2 + $0x70] sm:$0xff]
    %v89 = vld [vmem:[#allocation2 + $0x78] sm:$0xff]
    %v90 = vld [vmem:[#allocation2 + $0x80] sm:$0xff]
    %v91 = vld [vmem:[#allocation2 + $0x88] sm:$0xff]
    %v92 = vld [vmem:[#allocation2 + $0x90] sm:$0xff]
    %v93 = vld [vmem:[#allocation2 + $0x98] sm:$0xff]
    %v94 = vld [vmem:[#allocation2 + $0xa0] sm:$0xff]
    %v95 = vld [vmem:[#allocation2 + $0xa8] sm:$0xff]
    %v96 = vld [vmem:[#allocation2 + $0xb0] sm:$0xff]
    %v97 = vld [vmem:[#allocation2 + $0xb8] sm:$0xff]
    %v98 = vld [vmem:[#allocation2 + $0xc0] sm:$0xff]
    %v99 = vld [vmem:[#allocation2 + $0xc8] sm:$0xff]
    %v100 = vld [vmem:[#allocation2 + $0xd0] sm:$0xff]
    %v101 = vld [vmem:[#allocation2 + $0xd8] sm:$0xff]
    %v102 = vld [vmem:[#allocation2 + $0xe0] sm:$0xff]
    %v103 = vld [vmem:[#allocation2 + $0xe8] sm:$0xff]
    %v104 = vld [vmem:[#allocation2 + $0xf0] sm:$0xff]
    %v105 = vld [vmem:[#allocation2 + $0xf8] sm:$0xff]
    %v106 = vld [vmem:[%s1] sm:$0x3]
    %v107 = vld [vmem:[#allocation4] sm:$0xff]
    %v108 = vld [vmem:[#allocation4 + $0x8] sm:$0xff]
    %v109 = vld [vmem:[#allocation4 + $0x10] sm:$0xff]
    %v110 = vld [vmem:[#allocation4 + $0x18] sm:$0xff]
    %v111 = vld [vmem:[#allocation4 + $0x20] sm:$0xff]
    %v112 = vld [vmem:[#allocation4 + $0x28] sm:$0xff]
    %v113 = vld [vmem:[#allocation4 + $0x30] sm:$0xff]
    %v114 = vld [vmem:[#allocation4 + $0x38] sm:$0xff]
    %v115 = vld [vmem:[#allocation4 + $0x40] sm:$0xff]
    %v116 = vld [vmem:[#allocation4 + $0x48] sm:$0xff]
    %v117 = vld [vmem:[#allocation4 + $0x50] sm:$0xff]
    %v118 = vld [vmem:[#allocation4 + $0x58] sm:$0xff]
    %v119 = vld [vmem:[#allocation4 + $0x60] sm:$0xff]
    %v120 = vld [vmem:[#allocation4 + $0x68] sm:$0xff]
    %v121 = vld [vmem:[#allocation4 + $0x70] sm:$0xff]
    %v122 = vld [vmem:[#allocation4 + $0x78] sm:$0xff]
    %v123 = vld [vmem:[#allocation4 + $0x80] sm:$0xff]
    %v124 = vld [vmem:[#allocation4 + $0x88] sm:$0xff]
    %v125 = vld [vmem:[#allocation4 + $0x90] sm:$0xff]
    %v126 = vld [vmem:[#allocation4 + $0x98] sm:$0xff]
    %v127 = vld [vmem:[#allocation4 + $0xa0] sm:$0xff]
    %v128 = vld [vmem:[#allocation4 + $0xa8] sm:$0xff]
    %v129 = vld [vmem:[#allocation4 + $0xb0] sm:$0xff]
    %v130 = vld [vmem:[#allocation4 + $0xb8] sm:$0xff]
    %v131 = vld [vmem:[#allocation4 + $0xc0] sm:$0xff]
    %v132 = vld [vmem:[#allocation4 + $0xc8] sm:$0xff]
    %v133 = vld [vmem:[#allocation4 + $0xd0] sm:$0xff]
    %v134 = vld [vmem:[#allocation4 + $0xd8] sm:$0xff]
    %v135 = vld [vmem:[#allocation4 + $0xe0] sm:$0xff]
    %v136 = vld [vmem:[#allocation4 + $0xe8] sm:$0xff]
    %v137 = vld [vmem:[#allocation4 + $0xf0] sm:$0xff]
    %v138 = vld [vmem:[#allocation4 + $0xf8] sm:$0xff]
    %v139 = vld [vmem:[#allocation4 + $0x100] sm:$0xff]
    %v140 = vld [vmem:[#allocation4 + $0x108] sm:$0xff]
    %v141 = vld [vmem:[#allocation4 + $0x110] sm:$0xff]
    %v142 = vld [vmem:[#allocation4 + $0x118] sm:$0xff]
    %v143 = vld [vmem:[#allocation4 + $0x120] sm:$0xff]
    %v144 = vld [vmem:[#allocation4 + $0x128] sm:$0xff]
    %v145 = vld [vmem:[#allocation4 + $0x130] sm:$0xff]
    %v146 = vld [vmem:[#allocation4 + $0x138] sm:$0xff]
    %v147 = vld [vmem:[#allocation4 + $0x140] sm:$0xff]
    %v148 = vld [vmem:[#allocation4 + $0x148] sm:$0xff]
    %v149 = vld [vmem:[#allocation4 + $0x150] sm:$0xff]
    %v150 = vld [vmem:[#allocation4 + $0x158] sm:$0xff]
    %v151 = vld [vmem:[#allocation4 + $0x160] sm:$0xff]
    %v152 = vld [vmem:[#allocation4 + $0x168] sm:$0xff]
    %v153 = vld [vmem:[#allocation4 + $0x170] sm:$0xff]
    %v154 = vld [vmem:[#allocation4 + $0x178] sm:$0xff]
    %v155 = vld [vmem:[#allocation4 + $0x180] sm:$0xff]
    %v156 = vld [vmem:[#allocation4 + $0x188] sm:$0xff]
    %v157 = vld [vmem:[#allocation4 + $0x190] sm:$0xff]
    %v158 = vld [vmem:[#allocation4 + $0x198] sm:$0xff]
    %v159 = vld [vmem:[#allocation4 + $0x1a0] sm:$0xff]
    %v160 = vld [vmem:[#allocation4 + $0x1a8] sm:$0xff]
    %v161 = vld [vmem:[#allocation4 + $0x1b0] sm:$0xff]
    %v162 = vld [vmem:[#allocation4 + $0x1b8] sm:$0xff]
    %v163 = vld [vmem:[#allocation4 + $0x1c0] sm:$0xff]
    %v164 = vld [vmem:[#allocation4 + $0x1c8] sm:$0xff]
    %v165 = vld [vmem:[#allocation4 + $0x1d0] sm:$0xff]
    %v166 = vld [vmem:[#allocation4 + $0x1d8] sm:$0xff]
    %v167 = vld [vmem:[#allocation4 + $0x1e0] sm:$0xff]
    %v168 = vld [vmem:[#allocation4 + $0x1e8] sm:$0xff]
    %v169 = vld [vmem:[#allocation4 + $0x1f0] sm:$0xff]
    %v170 = vld [vmem:[#allocation4 + $0x1f8] sm:$0xff]
    %v171 = vld [vmem:[#allocation4 + $0x200] sm:$0xff]
    %v172 = vld [vmem:[#allocation4 + $0x208] sm:$0xff]
    %v173 = vld [vmem:[#allocation4 + $0x210] sm:$0xff]
    %v174 = vld [vmem:[#allocation4 + $0x218] sm:$0xff]
    %v175 = vld [vmem:[#allocation4 + $0x220] sm:$0xff]
    %v176 = vld [vmem:[#allocation4 + $0x228] sm:$0xff]
    %v177 = vld [vmem:[#allocation4 + $0x230] sm:$0xff]
    %v178 = vld [vmem:[#allocation4 + $0x238] sm:$0xff]
    %v179 = vld [vmem:[#allocation4 + $0x240] sm:$0xff]
    %v180 = vld [vmem:[#allocation4 + $0x248] sm:$0xff]
    %v181 = vld [vmem:[#allocation4 + $0x250] sm:$0xff]
    %v182 = vld [vmem:[#allocation4 + $0x258] sm:$0xff]
    %v183 = vld [vmem:[#allocation4 + $0x260] sm:$0xff]
    %v184 = vld [vmem:[#allocation4 + $0x268] sm:$0xff]
    %v185 = vld [vmem:[#allocation4 + $0x270] sm:$0xff]
    %v186 = vld [vmem:[#allocation4 + $0x278] sm:$0xff]
    %v187 = vld [vmem:[#allocation4 + $0x280] sm:$0xff]
    %v188 = vld [vmem:[#allocation4 + $0x288] sm:$0xff]
    %v189 = vld [vmem:[#allocation4 + $0x290] sm:$0xff]
    %v190 = vld [vmem:[#allocation4 + $0x298] sm:$0xff]
    %v191 = vld [vmem:[#allocation4 + $0x2a0] sm:$0xff]
    %v192 = vld [vmem:[#allocation4 + $0x2a8] sm:$0xff]
    %v193 = vld [vmem:[#allocation4 + $0x2b0] sm:$0xff]
    %v194 = vld [vmem:[#allocation4 + $0x2b8] sm:$0xff]
    %v195 = vld [vmem:[#allocation4 + $0x2c0] sm:$0xff]
    %v196 = vld [vmem:[#allocation4 + $0x2c8] sm:$0xff]
    %v197 = vld [vmem:[#allocation4 + $0x2d0] sm:$0xff]
    %v198 = vld [vmem:[#allocation4 + $0x2d8] sm:$0xff]
    %v199 = vld [vmem:[#allocation4 + $0x2e0] sm:$0xff]
    %v200 = vld [vmem:[#allocation4 + $0x2e8] sm:$0xff]
    %v201 = vld [vmem:[#allocation4 + $0x2f0] sm:$0xff]
    %v202 = vld [vmem:[#allocation4 + $0x2f8] sm:$0xff]
    %v203 = vld [vmem:[#allocation4 + $0x300] sm:$0xff]
    %v204 = vld [vmem:[#allocation4 + $0x308] sm:$0xff]
    %v205 = vld [vmem:[#allocation4 + $0x310] sm:$0xff]
    %v206 = vld [vmem:[#allocation4 + $0x318] sm:$0xff]
    %v207 = vld [vmem:[#allocation4 + $0x320] sm:$0xff]
    %v208 = vld [vmem:[#allocation4 + $0x328] sm:$0xff]
    %v209 = vld [vmem:[#allocation4 + $0x330] sm:$0xff]
    %v210 = vld [vmem:[#allocation4 + $0x338] sm:$0xff]
    %v211 = vld [vmem:[#allocation4 + $0x340] sm:$0xff]
    %v212 = vld [vmem:[#allocation4 + $0x348] sm:$0xff]
    %v213 = vld [vmem:[#allocation4 + $0x350] sm:$0xff]
    %v214 = vld [vmem:[#allocation4 + $0x358] sm:$0xff]
    %v215 = vld [vmem:[#allocation4 + $0x360] sm:$0xff]
    %v216 = vld [vmem:[#allocation4 + $0x368] sm:$0xff]
    %v217 = vld [vmem:[#allocation4 + $0x370] sm:$0xff]
    %v218 = vld [vmem:[#allocation4 + $0x378] sm:$0xff]
    %v219 = vld [vmem:[#allocation4 + $0x380] sm:$0xff]
    %v220 = vld [vmem:[#allocation4 + $0x388] sm:$0xff]
    %v221 = vld [vmem:[#allocation4 + $0x390] sm:$0xff]
    %v222 = vld [vmem:[#allocation4 + $0x398] sm:$0xff]
    %v223 = vld [vmem:[#allocation4 + $0x3a0] sm:$0xff]
    %v224 = vld [vmem:[#allocation4 + $0x3a8] sm:$0xff]
    %v225 = vld [vmem:[#allocation4 + $0x3b0] sm:$0xff]
    %v226 = vld [vmem:[#allocation4 + $0x3b8] sm:$0xff]
    %v227 = vld [vmem:[#allocation4 + $0x3c0] sm:$0xff]
    %v228 = vld [vmem:[#allocation4 + $0x3c8] sm:$0xff]
    %v229 = vld [vmem:[#allocation4 + $0x3d0] sm:$0xff]
    %v230 = vld [vmem:[#allocation4 + $0x3d8] sm:$0xff]
    %v231 = vld [vmem:[#allocation4 + $0x3e0] sm:$0xff]
    %v232 = vld [vmem:[#allocation4 + $0x3e8] sm:$0xff]
    %v233 = vld [vmem:[#allocation4 + $0x3f0] sm:$0xff]
    %v234 = vld [vmem:[#allocation4 + $0x3f8] sm:$0xff]
    %v236 = vperm.slane %v106, 0
    %v237 = vperm.slane %v106, 1
    %240 = vmatpush.msra.mxu0 %v167
    %241 = vmatpush.msra.mxu0 %v163
    %242 = vmatpush.msra.mxu0 %v159
    %243 = vmatpush.msra.mxu0 %v155
    %244 = vmatpush.msra.mxu0 %v151
    %245 = vmatpush.msra.mxu0 %v147
    %246 = vmatpush.msra.mxu0 %v143
    %247 = vmatpush.msra.mxu0 %v139
    %248 = vmatpush.msra.mxu0 %v135
    %249 = vmatpush.msra.mxu0 %v131
    %250 = vmatpush.msra.mxu0 %v127
    %251 = vmatpush.msra.mxu0 %v123
    %252 = vmatpush.msra.mxu0 %v119
    %253 = vmatpush.msra.mxu0 %v115
    %254 = vmatpush.msra.mxu0 %v111
    %255 = vmatpush.msra.mxu0 %v107
    %256 = vmatmul.f32.gmra.mxu0 %v236
    %v257 = vpop.f32.mrf.mxu0
    %v258 = vadd.f32 0.0, %v257
    %259 = vdwg.mxu0
    %260 = vmatpush.msra.mxu0 %v231
    %261 = vmatpush.msra.mxu0 %v227
    %262 = vmatpush.msra.mxu0 %v223
    %263 = vmatpush.msra.mxu0 %v219
    %264 = vmatpush.msra.mxu0 %v215
    %265 = vmatpush.msra.mxu0 %v211
    %266 = vmatpush.msra.mxu0 %v207
    %267 = vmatpush.msra.mxu0 %v203
    %268 = vmatpush.msra.mxu0 %v199
    %269 = vmatpush.msra.mxu0 %v195
    %270 = vmatpush.msra.mxu0 %v191
    %271 = vmatpush.msra.mxu0 %v187
    %272 = vmatpush.msra.mxu0 %v183
    %273 = vmatpush.msra.mxu0 %v179
    %274 = vmatpush.msra.mxu0 %v175
    %275 = vmatpush.msra.mxu0 %v171
    %276 = vmatmul.f32.gmra.mxu0 %v237
    %v277 = vpop.f32.mrf.mxu0
    %v278 = vadd.f32 %v258, %v277
    %279 = vdwg.mxu0
    %280 = vmatpush.msra.mxu0 %v168
    %281 = vmatpush.msra.mxu0 %v164
    %282 = vmatpush.msra.mxu0 %v160
    %283 = vmatpush.msra.mxu0 %v156
    %284 = vmatpush.msra.mxu0 %v152
    %285 = vmatpush.msra.mxu0 %v148
    %286 = vmatpush.msra.mxu0 %v144
    %287 = vmatpush.msra.mxu0 %v140
    %288 = vmatpush.msra.mxu0 %v136
    %289 = vmatpush.msra.mxu0 %v132
    %290 = vmatpush.msra.mxu0 %v128
    %291 = vmatpush.msra.mxu0 %v124
    %292 = vmatpush.msra.mxu0 %v120
    %293 = vmatpush.msra.mxu0 %v116
    %294 = vmatpush.msra.mxu0 %v112
    %295 = vmatpush.msra.mxu0 %v108
    %296 = vmatmul.f32.gmra.mxu0 %v236
    %v297 = vpop.f32.mrf.mxu0
    %v298 = vadd.f32 0.0, %v297
    %299 = vdwg.mxu0
    %300 = vmatpush.msra.mxu0 %v232
    %301 = vmatpush.msra.mxu0 %v228
    %302 = vmatpush.msra.mxu0 %v224
    %303 = vmatpush.msra.mxu0 %v220
    %304 = vmatpush.msra.mxu0 %v216
    %305 = vmatpush.msra.mxu0 %v212
    %306 = vmatpush.msra.mxu0 %v208
    %307 = vmatpush.msra.mxu0 %v204
    %308 = vmatpush.msra.mxu0 %v200
    %309 = vmatpush.msra.mxu0 %v196
    %310 = vmatpush.msra.mxu0 %v192
    %311 = vmatpush.msra.mxu0 %v188
    %312 = vmatpush.msra.mxu0 %v184
    %313 = vmatpush.msra.mxu0 %v180
    %314 = vmatpush.msra.mxu0 %v176
    %315 = vmatpush.msra.mxu0 %v172
    %316 = vmatmul.f32.gmra.mxu0 %v237
    %v317 = vpop.f32.mrf.mxu0
    %v318 = vadd.f32 %v298, %v317
    %319 = vdwg.mxu0
    %320 = vmatpush.msra.mxu0 %v169
    %321 = vmatpush.msra.mxu0 %v165
    %322 = vmatpush.msra.mxu0 %v161
    %323 = vmatpush.msra.mxu0 %v157
    %324 = vmatpush.msra.mxu0 %v153
    %325 = vmatpush.msra.mxu0 %v149
    %326 = vmatpush.msra.mxu0 %v145
    %327 = vmatpush.msra.mxu0 %v141
    %328 = vmatpush.msra.mxu0 %v137
    %329 = vmatpush.msra.mxu0 %v133
    %330 = vmatpush.msra.mxu0 %v129
    %331 = vmatpush.msra.mxu0 %v125
    %332 = vmatpush.msra.mxu0 %v121
    %333 = vmatpush.msra.mxu0 %v117
    %334 = vmatpush.msra.mxu0 %v113
    %335 = vmatpush.msra.mxu0 %v109
    %336 = vmatmul.f32.gmra.mxu0 %v236
    %v337 = vpop.f32.mrf.mxu0
    %v338 = vadd.f32 0.0, %v337
    %339 = vdwg.mxu0
    %340 = vmatpush.msra.mxu0 %v233
    %341 = vmatpush.msra.mxu0 %v229
    %342 = vmatpush.msra.mxu0 %v225
    %343 = vmatpush.msra.mxu0 %v221
    %344 = vmatpush.msra.mxu0 %v217
    %345 = vmatpush.msra.mxu0 %v213
    %346 = vmatpush.msra.mxu0 %v209
    %347 = vmatpush.msra.mxu0 %v205
    %348 = vmatpush.msra.mxu0 %v201
    %349 = vmatpush.msra.mxu0 %v197
    %350 = vmatpush.msra.mxu0 %v193
    %351 = vmatpush.msra.mxu0 %v189
    %352 = vmatpush.msra.mxu0 %v185
    %353 = vmatpush.msra.mxu0 %v181
    %354 = vmatpush.msra.mxu0 %v177
    %355 = vmatpush.msra.mxu0 %v173
    %356 = vmatmul.f32.gmra.mxu0 %v237
    %v357 = vpop.f32.mrf.mxu0
    %v358 = vadd.f32 %v338, %v357
    %359 = vdwg.mxu0
    %360 = vmatpush.msra.mxu0 %v170
    %361 = vmatpush.msra.mxu0 %v166
    %362 = vmatpush.msra.mxu0 %v162
    %363 = vmatpush.msra.mxu0 %v158
    %364 = vmatpush.msra.mxu0 %v154
    %365 = vmatpush.msra.mxu0 %v150
    %366 = vmatpush.msra.mxu0 %v146
    %367 = vmatpush.msra.mxu0 %v142
    %368 = vmatpush.msra.mxu0 %v138
    %369 = vmatpush.msra.mxu0 %v134
    %370 = vmatpush.msra.mxu0 %v130
    %371 = vmatpush.msra.mxu0 %v126
    %372 = vmatpush.msra.mxu0 %v122
    %373 = vmatpush.msra.mxu0 %v118
    %374 = vmatpush.msra.mxu0 %v114
    %375 = vmatpush.msra.mxu0 %v110
    %376 = vmatmul.f32.gmra.mxu0 %v236
    %v377 = vpop.f32.mrf.mxu0
    %v378 = vadd.f32 0.0, %v377
    %379 = vdwg.mxu0
    %380 = vmatpush.msra.mxu0 %v234
    %381 = vmatpush.msra.mxu0 %v230
    %382 = vmatpush.msra.mxu0 %v226
    %383 = vmatpush.msra.mxu0 %v222
    %384 = vmatpush.msra.mxu0 %v218
    %385 = vmatpush.msra.mxu0 %v214
    %386 = vmatpush.msra.mxu0 %v210
    %387 = vmatpush.msra.mxu0 %v206
    %388 = vmatpush.msra.mxu0 %v202
    %389 = vmatpush.msra.mxu0 %v198
    %390 = vmatpush.msra.mxu0 %v194
    %391 = vmatpush.msra.mxu0 %v190
    %392 = vmatpush.msra.mxu0 %v186
    %393 = vmatpush.msra.mxu0 %v182
    %394 = vmatpush.msra.mxu0 %v178
    %395 = vmatpush.msra.mxu0 %v174
    %396 = vmatmul.f32.gmra.mxu0 %v237
    %v397 = vpop.f32.mrf.mxu0
    %v398 = vadd.f32 %v378, %v397
    %399 = vdwg.mxu0
    %vm400 = vcmask 523264
    %v402 = vsel %vm400, %v73, 0
    %404 = vmatpush.msra.mxu0 0.0
    %405 = vmatpush.msra.mxu0 0.0
    %406 = vmatpush.msra.mxu0 0.0
    %407 = vmatpush.msra.mxu0 0.0
    %408 = vmatpush.msra.mxu0 0.0
    %409 = vmatpush.msra.mxu0 0.0
    %410 = vmatpush.msra.mxu0 0.0
    %411 = vmatpush.msra.mxu0 0.0
    %412 = vmatpush.msra.mxu0 %v102
    %413 = vmatpush.msra.mxu0 %v98
    %414 = vmatpush.msra.mxu0 %v94
    %415 = vmatpush.msra.mxu0 %v90
    %416 = vmatpush.msra.mxu0 %v86
    %417 = vmatpush.msra.mxu0 %v82
    %418 = vmatpush.msra.mxu0 %v78
    %419 = vmatpush.msra.mxu0 %v74
    %420 = vmatmul.f32.gmra.mxu0 %v402
    %v421 = vpop.f32.mrf.mxu0
    %v422 = vadd.f32 %v278, %v421
    %423 = vdwg.mxu0
    %424 = vmatpush.msra.mxu0 0.0
    %425 = vmatpush.msra.mxu0 0.0
    %426 = vmatpush.msra.mxu0 0.0
    %427 = vmatpush.msra.mxu0 0.0
    %428 = vmatpush.msra.mxu0 0.0
    %429 = vmatpush.msra.mxu0 0.0
    %430 = vmatpush.msra.mxu0 0.0
    %431 = vmatpush.msra.mxu0 0.0
    %432 = vmatpush.msra.mxu0 %v103
    %433 = vmatpush.msra.mxu0 %v99
    %434 = vmatpush.msra.mxu0 %v95
    %435 = vmatpush.msra.mxu0 %v91
    %436 = vmatpush.msra.mxu0 %v87
    %437 = vmatpush.msra.mxu0 %v83
    %438 = vmatpush.msra.mxu0 %v79
    %439 = vmatpush.msra.mxu0 %v75
    %440 = vmatmul.f32.gmra.mxu0 %v402
    %v441 = vpop.f32.mrf.mxu0
    %v442 = vadd.f32 %v318, %v441
    %443 = vdwg.mxu0
    %444 = vmatpush.msra.mxu0 0.0
    %445 = vmatpush.msra.mxu0 0.0
    %446 = vmatpush.msra.mxu0 0.0
    %447 = vmatpush.msra.mxu0 0.0
    %448 = vmatpush.msra.mxu0 0.0
    %449 = vmatpush.msra.mxu0 0.0
    %450 = vmatpush.msra.mxu0 0.0
    %451 = vmatpush.msra.mxu0 0.0
    %452 = vmatpush.msra.mxu0 %v104
    %453 = vmatpush.msra.mxu0 %v100
    %454 = vmatpush.msra.mxu0 %v96
    %455 = vmatpush.msra.mxu0 %v92
    %456 = vmatpush.msra.mxu0 %v88
    %457 = vmatpush.msra.mxu0 %v84
    %458 = vmatpush.msra.mxu0 %v80
    %459 = vmatpush.msra.mxu0 %v76
    %460 = vmatmul.f32.gmra.mxu0 %v402
    %v461 = vpop.f32.mrf.mxu0
    %v462 = vadd.f32 %v358, %v461
    %463 = vdwg.mxu0
    %464 = vmatpush.msra.mxu0 0.0
    %465 = vmatpush.msra.mxu0 0.0
    %466 = vmatpush.msra.mxu0 0.0
    %467 = vmatpush.msra.mxu0 0.0
    %468 = vmatpush.msra.mxu0 0.0
    %469 = vmatpush.msra.mxu0 0.0
    %470 = vmatpush.msra.mxu0 0.0
    %471 = vmatpush.msra.mxu0 0.0
    %472 = vmatpush.msra.mxu0 %v105
    %473 = vmatpush.msra.mxu0 %v101
    %474 = vmatpush.msra.mxu0 %v97
    %475 = vmatpush.msra.mxu0 %v93
    %476 = vmatpush.msra.mxu0 %v89
    %477 = vmatpush.msra.mxu0 %v85
    %478 = vmatpush.msra.mxu0 %v81
    %479 = vmatpush.msra.mxu0 %v77
    %480 = vmatmul.f32.gmra.mxu0 %v402
    %v481 = vpop.f32.mrf.mxu0
    %v482 = vadd.f32 %v398, %v481
    %483 = vdwg.mxu0
    %v484 = vld [vmem:[%s4] sm:$0xf]
    %v486 = vperm.slane %v484, 0
    %v487 = vperm.slane %v484, 1
    %v488 = vperm.slane %v484, 2
    %v489 = vperm.slane %v484, 3
    %v494 = vadd.f32 %v422, %v486
    %v495 = vadd.f32 %v442, %v487
    %v496 = vadd.f32 %v462, %v488
    %v497 = vadd.f32 %v482, %v489
    %v498 = vmax.f32 %v494, 0.0
    %v499 = vmax.f32 %v495, 0.0
    %v500 = vmax.f32 %v496, 0.0
    %v501 = vmax.f32 %v497, 0.0
    %v502 = vld [vmem:[#allocation6] sm:$0xff]
    %v503 = vld [vmem:[#allocation6 + $0x8] sm:$0xff]
    %v504 = vld [vmem:[#allocation6 + $0x10] sm:$0xff]
    %v505 = vld [vmem:[#allocation6 + $0x18] sm:$0xff]
    %v506 = vld [vmem:[#allocation6 + $0x20] sm:$0xff]
    %v507 = vld [vmem:[#allocation6 + $0x28] sm:$0xff]
    %v508 = vld [vmem:[#allocation6 + $0x30] sm:$0xff]
    %v509 = vld [vmem:[#allocation6 + $0x38] sm:$0xff]
    %v510 = vld [vmem:[#allocation6 + $0x40] sm:$0xff]
    %v511 = vld [vmem:[#allocation6 + $0x48] sm:$0xff]
    %v512 = vld [vmem:[#allocation6 + $0x50] sm:$0xff]
    %v513 = vld [vmem:[#allocation6 + $0x58] sm:$0xff]
    %v514 = vld [vmem:[#allocation6 + $0x60] sm:$0xff]
    %v515 = vld [vmem:[#allocation6 + $0x68] sm:$0xff]
    %v516 = vld [vmem:[#allocation6 + $0x70] sm:$0xff]
    %v517 = vld [vmem:[#allocation6 + $0x78] sm:$0xff]
    %v518 = vld [vmem:[#allocation6 + $0x80] sm:$0xff]
    %v519 = vld [vmem:[#allocation6 + $0x88] sm:$0xff]
    %v520 = vld [vmem:[#allocation6 + $0x90] sm:$0xff]
    %v521 = vld [vmem:[#allocation6 + $0x98] sm:$0xff]
    %v522 = vld [vmem:[#allocation6 + $0xa0] sm:$0xff]
    %v523 = vld [vmem:[#allocation6 + $0xa8] sm:$0xff]
    %v524 = vld [vmem:[#allocation6 + $0xb0] sm:$0xff]
    %v525 = vld [vmem:[#allocation6 + $0xb8] sm:$0xff]
    %v526 = vld [vmem:[#allocation6 + $0xc0] sm:$0xff]
    %v527 = vld [vmem:[#allocation6 + $0xc8] sm:$0xff]
    %v528 = vld [vmem:[#allocation6 + $0xd0] sm:$0xff]
    %v529 = vld [vmem:[#allocation6 + $0xd8] sm:$0xff]
    %v530 = vld [vmem:[#allocation6 + $0xe0] sm:$0xff]
    %v531 = vld [vmem:[#allocation6 + $0xe8] sm:$0xff]
    %v532 = vld [vmem:[#allocation6 + $0xf0] sm:$0xff]
    %v533 = vld [vmem:[#allocation6 + $0xf8] sm:$0xff]
    %v534 = vld [vmem:[#allocation6 + $0x100] sm:$0xff]
    %v535 = vld [vmem:[#allocation6 + $0x108] sm:$0xff]
    %v536 = vld [vmem:[#allocation6 + $0x110] sm:$0xff]
    %v537 = vld [vmem:[#allocation6 + $0x118] sm:$0xff]
    %v538 = vld [vmem:[#allocation6 + $0x120] sm:$0xff]
    %v539 = vld [vmem:[#allocation6 + $0x128] sm:$0xff]
    %v540 = vld [vmem:[#allocation6 + $0x130] sm:$0xff]
    %v541 = vld [vmem:[#allocation6 + $0x138] sm:$0xff]
    %v542 = vld [vmem:[#allocation6 + $0x140] sm:$0xff]
    %v543 = vld [vmem:[#allocation6 + $0x148] sm:$0xff]
    %v544 = vld [vmem:[#allocation6 + $0x150] sm:$0xff]
    %v545 = vld [vmem:[#allocation6 + $0x158] sm:$0xff]
    %v546 = vld [vmem:[#allocation6 + $0x160] sm:$0xff]
    %v547 = vld [vmem:[#allocation6 + $0x168] sm:$0xff]
    %v548 = vld [vmem:[#allocation6 + $0x170] sm:$0xff]
    %v549 = vld [vmem:[#allocation6 + $0x178] sm:$0xff]
    %v550 = vld [vmem:[#allocation6 + $0x180] sm:$0xff]
    %v551 = vld [vmem:[#allocation6 + $0x188] sm:$0xff]
    %v552 = vld [vmem:[#allocation6 + $0x190] sm:$0xff]
    %v553 = vld [vmem:[#allocation6 + $0x198] sm:$0xff]
    %v554 = vld [vmem:[#allocation6 + $0x1a0] sm:$0xff]
    %v555 = vld [vmem:[#allocation6 + $0x1a8] sm:$0xff]
    %v556 = vld [vmem:[#allocation6 + $0x1b0] sm:$0xff]
    %v557 = vld [vmem:[#allocation6 + $0x1b8] sm:$0xff]
    %v558 = vld [vmem:[#allocation6 + $0x1c0] sm:$0xff]
    %v559 = vld [vmem:[#allocation6 + $0x1c8] sm:$0xff]
    %v560 = vld [vmem:[#allocation6 + $0x1d0] sm:$0xff]
    %v561 = vld [vmem:[#allocation6 + $0x1d8] sm:$0xff]
    %v562 = vld [vmem:[#allocation6 + $0x1e0] sm:$0xff]
    %v563 = vld [vmem:[#allocation6 + $0x1e8] sm:$0xff]
    %v564 = vld [vmem:[#allocation6 + $0x1f0] sm:$0xff]
    %v565 = vld [vmem:[#allocation6 + $0x1f8] sm:$0xff]
    %v566 = vld [vmem:[%s6] sm:$0x1]
    %567 = vmatpush.msra.mxu0 %v517
    %568 = vmatpush.msra.mxu0 %v516
    %569 = vmatpush.msra.mxu0 %v515
    %570 = vmatpush.msra.mxu0 %v514
    %571 = vmatpush.msra.mxu0 %v513
    %572 = vmatpush.msra.mxu0 %v512
    %573 = vmatpush.msra.mxu0 %v511
    %574 = vmatpush.msra.mxu0 %v510
    %575 = vmatpush.msra.mxu0 %v509
    %576 = vmatpush.msra.mxu0 %v508
    %577 = vmatpush.msra.mxu0 %v507
    %578 = vmatpush.msra.mxu0 %v506
    %579 = vmatpush.msra.mxu0 %v505
    %580 = vmatpush.msra.mxu0 %v504
    %581 = vmatpush.msra.mxu0 %v503
    %582 = vmatpush.msra.mxu0 %v502
    %583 = vmatmul.f32.gmra.mxu0 %v498
    %v584 = vpop.f32.mrf.mxu0
    %v585 = vadd.f32 %v566, %v584
    %586 = vdwg.mxu0
    %587 = vmatpush.msra.mxu0 %v533
    %588 = vmatpush.msra.mxu0 %v532
    %589 = vmatpush.msra.mxu0 %v531
    %590 = vmatpush.msra.mxu0 %v530
    %591 = vmatpush.msra.mxu0 %v529
    %592 = vmatpush.msra.mxu0 %v528
    %593 = vmatpush.msra.mxu0 %v527
    %594 = vmatpush.msra.mxu0 %v526
    %595 = vmatpush.msra.mxu0 %v525
    %596 = vmatpush.msra.mxu0 %v524
    %597 = vmatpush.msra.mxu0 %v523
    %598 = vmatpush.msra.mxu0 %v522
    %599 = vmatpush.msra.mxu0 %v521
    %600 = vmatpush.msra.mxu0 %v520
    %601 = vmatpush.msra.mxu0 %v519
    %602 = vmatpush.msra.mxu0 %v518
    %603 = vmatmul.f32.gmra.mxu0 %v499
    %v604 = vpop.f32.mrf.mxu0
    %v605 = vadd.f32 %v585, %v604
    %606 = vdwg.mxu0
    %607 = vmatpush.msra.mxu0 %v549
    %608 = vmatpush.msra.mxu0 %v548
    %609 = vmatpush.msra.mxu0 %v547
    %610 = vmatpush.msra.mxu0 %v546
    %611 = vmatpush.msra.mxu0 %v545
    %612 = vmatpush.msra.mxu0 %v544
    %613 = vmatpush.msra.mxu0 %v543
    %614 = vmatpush.msra.mxu0 %v542
    %615 = vmatpush.msra.mxu0 %v541
    %616 = vmatpush.msra.mxu0 %v540
    %617 = vmatpush.msra.mxu0 %v539
    %618 = vmatpush.msra.mxu0 %v538
    %619 = vmatpush.msra.mxu0 %v537
    %620 = vmatpush.msra.mxu0 %v536
    %621 = vmatpush.msra.mxu0 %v535
    %622 = vmatpush.msra.mxu0 %v534
    %623 = vmatmul.f32.gmra.mxu0 %v500
    %v624 = vpop.f32.mrf.mxu0
    %v625 = vadd.f32 %v605, %v624
    %626 = vdwg.mxu0
    %627 = vmatpush.msra.mxu0 %v565
    %628 = vmatpush.msra.mxu0 %v564
    %629 = vmatpush.msra.mxu0 %v563
    %630 = vmatpush.msra.mxu0 %v562
    %631 = vmatpush.msra.mxu0 %v561
    %632 = vmatpush.msra.mxu0 %v560
    %633 = vmatpush.msra.mxu0 %v559
    %634 = vmatpush.msra.mxu0 %v558
    %635 = vmatpush.msra.mxu0 %v557
    %636 = vmatpush.msra.mxu0 %v556
    %637 = vmatpush.msra.mxu0 %v555
    %638 = vmatpush.msra.mxu0 %v554
    %639 = vmatpush.msra.mxu0 %v553
    %640 = vmatpush.msra.mxu0 %v552
    %641 = vmatpush.msra.mxu0 %v551
    %642 = vmatpush.msra.mxu0 %v550
    %643 = vmatmul.f32.gmra.mxu0 %v501
    %v644 = vpop.f32.mrf.mxu0
    %v645 = vadd.f32 %v625, %v644
    %646 = vdwg.mxu0
    %647 = vst [vmem:[%s7] sm:$0x1] %v645
    // Predicated region
    $region42: #{_forward_impl.1} parent=1 // pred_check
      _
    $region43: #{_forward_impl.1} parent=1 // pred_check_branch
      %649 = sbr.rel (0) target = $region45
    $region44: #{_forward_impl.1} parent=1 // pred_region
      _
    $region45: #{_forward_impl.1} parent=1 // pred_fallthru
      _
    // Predicated region
    $region46: #{_forward_impl.1} parent=1 // pred_check
      _
    $region47: #{_forward_impl.1} parent=1 // pred_check_branch
      %651 = sbr.rel (0) target = $region49
    $region48: #{_forward_impl.1} parent=1 // pred_region
      _
    $region49: #{_forward_impl.1} parent=1 // pred_fallthru
      _
    %652 = vsyncpa [#allocation3], 1
    %653 = vsyncpa [#allocation5], 1

</llo_original>
